<compile_context>
chip_gen: v5e
topology: v5e:2x2
jax: 0.10.0
libtpu: 0.0.40
codegen_flags: <defaults>
</compile_context>

<pallas_src>
import functools

import jax
import jax.numpy as jnp
from jax import lax
from jax.experimental import pallas as pl
from jax.experimental.pallas import tpu as pltpu


# ---------------------------------------------------------------------------
# Kernels
# ---------------------------------------------------------------------------

def _flat_kernel(x_ref, o_ref, *, shift, keep_cols):
    """Block = (b_blk, H*W); each row is one flattened image (lane-dense even
    for W < 128).  The 2-row vertical shift becomes a lane roll by 2*W; rows
    that read zero padding (global row >= H-2) are handled by the fused mask."""
    x = x_ref[...]
    rolled = pltpu.roll(x, shift=shift, axis=1)      # rolled[b,k] = x[b,(k+2W)%HW]
    col = lax.broadcasted_iota(jnp.int32, x.shape, 1)
    o_ref[...] = jnp.where(col < keep_cols, x - rolled, x)


def _rows_kernel(x_ref, o_ref, carry_ref, *, th, H):
    """Block = (b_blk, th, W) with W >= 128 (unmasked, lane-dense stores).  The
    vertical shift is a 2-row sublane shift.  The H axis is swept bottom-up and
    carry_ref keeps the top 2 rows of the block below (the halo), so tall
    images tile over H without re-reading HBM."""
    n_h = pl.num_programs(1)
    hb = n_h - 1 - pl.program_id(1)                  # H-block index (bottom-up)
    x = x_ref[...]                                   # (b_blk, th, W)
    below = carry_ref[...]                           # rows 0,1 of block hb+1
    shifted = jnp.concatenate([x[:, 2:, :], below], axis=1)
    grow = hb * th + lax.broadcasted_iota(jnp.int32, x.shape, 1)
    # Global rows >= H-2 subtract zero padding -> output is just x there; the
    # same mask also covers the (uninitialized) carry at the bottom H block.
    o_ref[...] = jnp.where(grow < H - 2, x - shifted, x)
    carry_ref[...] = x[:, :2, :]                     # halo for the block above


# ---------------------------------------------------------------------------
# Block sizing / per-generation tuning
# ---------------------------------------------------------------------------

def _sublane_multiple(dtype):
    """Second-minor tiling multiple: 8 for 4-byte, 16 for 2-byte, 32 for 1-byte."""
    return max(8, 32 // jnp.dtype(dtype).itemsize)


@functools.lru_cache(maxsize=None)
def _tpu_budget():
    """(target_block_bytes, vmem_cap_bytes) tuned per TPU generation."""
    kind = ""
    try:
        kind = jax.devices()[0].device_kind.lower()
    except Exception:
        pass
    phys = None
    try:
        phys = int(pltpu.get_tpu_info().vmem_capacity_bytes)
    except Exception:
        phys = None
    if not phys or phys <= 0:
        phys = (64 << 20) if "7" in kind else (128 << 20)
    if "7" in kind:                                  # v7x: 64 MiB per TensorCore
        phys = min(phys, 64 << 20)
    vmem_cap = max(32 << 20, phys - (16 << 20))      # leave compiler headroom
    target = (4 << 20) if "v5" in kind else (8 << 20)   # HBM roofline sweet spot
    return target, vmem_cap


def _pick_batch_block(batch, row_bytes, target_bytes, budget_bytes, multiple=1):
    """Images per grid step along the 'parallel' batch axis: aim at
    target_bytes, never exceed budget_bytes, keep >= 4 grid steps when the
    batch allows (>= 2 per v7x TensorCore), and respect the dtype sublane
    multiple unless the block spans the full batch (then full extent is legal)."""
    cap = max(1, budget_bytes // row_bytes)
    rows = max(1, min(batch, target_bytes // row_bytes, cap))
    min_steps = min(batch, 4)
    if min_steps > 1:
        rows = min(rows, pl.cdiv(batch, min_steps))
    if multiple > 1 and rows < batch:
        rows = max(multiple, (rows // multiple) * multiple)
    return int(min(rows, batch))


def _compiler_params(dim_semantics, block_bytes, vmem_cap):
    kwargs = dict(dimension_semantics=dim_semantics)
    needed = 6 * block_bytes          # in + out, double-buffered, + headroom
    # Raise the scoped-VMEM limit whenever we exceed the smallest generation
    # default (v5e: 16 MiB); cap below physical VMEM so compiler-internal
    # scratch still fits (48 MiB on v7x, 112 MiB on v5e/v6e).
    if needed > (16 << 20):
        kwargs["vmem_limit_bytes"] = int(min(needed, vmem_cap))
    return pltpu.CompilerParams(**kwargs)


# ---------------------------------------------------------------------------
# Paths
# ---------------------------------------------------------------------------

def _conv_flat(x_flat, H, W, dtype, target, block_budget, vmem_cap, sub):
    B, HW = x_flat.shape
    itemsize = jnp.dtype(dtype).itemsize
    row_bytes = HW * itemsize

    b_blk = _pick_batch_block(B, row_bytes, target, block_budget, multiple=sub)
    grid = (pl.cdiv(B, b_blk),)

    shift = ((H - 2) * W) % max(HW, 1)
    keep_cols = max(0, (H - 2) * W)
    kernel = functools.partial(_flat_kernel, shift=shift, keep_cols=keep_cols)

    return pl.pallas_call(
        kernel,
        out_shape=jax.ShapeDtypeStruct((B, HW), dtype),
        grid_spec=pltpu.PrefetchScalarGridSpec(
            num_scalar_prefetch=0,
            grid=grid,
            in_specs=[pl.BlockSpec((b_blk, HW), lambda b: (b, 0))],
            out_specs=pl.BlockSpec((b_blk, HW), lambda b: (b, 0)),
        ),
        compiler_params=_compiler_params(("parallel",), b_blk * row_bytes,
                                         vmem_cap),
    )(x_flat)


def _conv_rows(x3, H, W, dtype, target, block_budget, vmem_cap, sub):
    B = x3.shape[0]
    itemsize = jnp.dtype(dtype).itemsize
    img_bytes = H * W * itemsize

    # Tile H only when one image per step would exceed the target block size.
    if img_bytes <= target or H <= sub:
        th = H
    else:
        th = max(sub, min(H, (target // (W * itemsize)) // sub * sub))
        while th > sub and th * W * itemsize > block_budget:
            th -= sub
        # Prefer a tile height that divides H so every block is full; otherwise
        # the padded boundary block is handled by the global-row mask.
        for cand in range(th, sub - 1, -sub):
            if H % cand == 0:
                th = cand
                break
    n_h = pl.cdiv(H, th)

    tile_bytes = th * W * itemsize
    b_blk = _pick_batch_block(B, tile_bytes, target, block_budget)
    grid = (pl.cdiv(B, b_blk), n_h)

    def idx(b, h):
        return (b, n_h - 1 - h, 0)        # sweep H bottom-up (halo carry)

    kernel = functools.partial(_rows_kernel, th=th, H=H)

    return pl.pallas_call(
        kernel,
        out_shape=jax.ShapeDtypeStruct((B, H, W), dtype),
        grid_spec=pltpu.PrefetchScalarGridSpec(
            num_scalar_prefetch=0,
            grid=grid,
            in_specs=[pl.BlockSpec((b_blk, th, W), idx)],
            out_specs=pl.BlockSpec((b_blk, th, W), idx),
            scratch_shapes=[pltpu.VMEM((b_blk, 2, W), dtype)],
        ),
        # TODO(synk): on v7x, sweep pipeline_mode=pl.Buffered(3) on the input
        # spec only if an xprof trace shows exposed DMA-issue gaps.
        compiler_params=_compiler_params(("parallel", "arbitrary"),
                                         b_blk * tile_bytes, vmem_cap),
    )(x3)


# ---------------------------------------------------------------------------
# Public entry point
# ---------------------------------------------------------------------------

def conv_d516(x, *, target_block_bytes=None, vmem_cap_bytes=None):
    """Pallas TPU forward of Conv_d516: out[n,0,i,j] = x[n,0,i,j] - x[n,0,i+2,j]
    (zero padded), identical to F.conv2d(x, fixed 5x5 kernel, padding=2)."""
    N, C, H, W = x.shape
    assert C == 1, "Conv_d516 expects a single input channel"
    B = N * C

    auto_target, auto_cap = _tpu_budget()
    target = int(target_block_bytes or auto_target)
    vmem_cap = int(vmem_cap_bytes or auto_cap)
    block_budget = max(1, vmem_cap // 6)    # 6x block = in+out double-buffered

    sub = _sublane_multiple(x.dtype)
    itemsize = jnp.dtype(x.dtype).itemsize
    row_bytes = H * W * itemsize

    # W >= 128: 3-D blocks, vertical shift = sublane shift, unmasked stores.
    # W <  128: flatten each image into one lane-dense row (H*W lanes) unless a
    #           minimal flattened block would not fit VMEM; then fall back to
    #           (masked-store) 3-D blocks with H tiling, which always fits.
    # TODO(synk): lane-axis (W) tiling for pathologically wide single rows is
    # not implemented; no realistic input needs it.
    use_flat = (H <= 2) or (W < 128 and sub * row_bytes <= block_budget)

    if use_flat:
        out = _conv_flat(x.reshape(B, H * W), H, W, x.dtype,
                         target, block_budget, vmem_cap, sub)
    else:
        out = _conv_rows(x.reshape(B, H, W), H, W, x.dtype,
                         target, block_budget, vmem_cap, sub)
    return out.reshape(N, C, H, W)


def conv_d516_ref(x):
    """Pure-JAX reference of F.conv2d(x, fixed 5x5 kernel, padding=2)."""
    N, C, H, W = x.shape
    shifted = jnp.pad(x, ((0, 0), (0, 0), (0, 2), (0, 0)))[:, :, 2:2 + H, :]
    return x - shifted


if __name__ == "__main__":
    key = jax.random.PRNGKey(0)
    k1, k2, k3 = jax.random.split(key, 3)

    # 1) Small image, W < 128 -> flattened lane-dense path.
    x1 = jax.random.normal(k1, (2, 1, 16, 16), dtype=jnp.float32)
    o1 = jax.block_until_ready(conv_d516(x1))
    assert o1.shape == x1.shape
    assert jnp.allclose(o1, conv_d516_ref(x1), atol=1e-6), "flat path mismatch"

    # 2) W >= 128 -> 3-D sublane-shift path (single H tile per image).
    x2 = jax.random.normal(k2, (4, 1, 64, 128), dtype=jnp.float32)
    o2 = jax.block_until_ready(conv_d516(x2))
    assert jnp.allclose(o2, conv_d516_ref(x2), atol=1e-6), "rows path mismatch"

    # 3) Tiny target block forces H tiling -> exercises the bottom-up halo carry.
    x3 = jax.random.normal(k3, (2, 1, 64, 128), dtype=jnp.float32)
    o3 = jax.block_until_ready(conv_d516(x3, target_block_bytes=16 << 10))
    assert jnp.allclose(o3, conv_d516_ref(x3), atol=1e-6), "H-tiled path mismatch"

    print("KERNEL_OK")
</pallas_src>

<mosaic_0001>
module attributes {stable_mosaic.version = 11 : i64} {
  func.func @_flat_kernel(%arg0: i32, %arg1: memref<2x256xf32, #tpu.memory_space<vmem>>, %arg2: memref<2x256xf32, #tpu.memory_space<vmem>>) attributes {dimension_semantics = [#tpu.dimension_semantics<parallel>], iteration_bounds = array<i64: 1>, scalar_prefetch = 0 : i64, scratch_operands = 0 : i64, tpu.core_type = #tpu.core_type<tc>, window_params = [{transform_indices = @transform_0, window_bounds = array<i64: 2, 256>}, {transform_indices = @transform_1, window_bounds = array<i64: 2, 256>}]} {
    %c0 = arith.constant 0 : index
    %c0_0 = arith.constant 0 : index
    %0 = vector.load %arg1[%c0, %c0_0] : memref<2x256xf32, #tpu.memory_space<vmem>>, vector<2x256xf32>
    %c224_i32 = arith.constant 224 : i32
    %1 = tpu.dynamic_rotate %0 by %c224_i32 dim 1 : vector<2x256xf32>, i32 -> vector<2x256xf32>
    %2 = tpu.iota {dimensions = array<i32: 1>} : vector<2x256xi32>
    %c224_i32_1 = arith.constant 224 : i32
    %3 = vector.broadcast %c224_i32_1 : i32 to vector<2x256xi32>
    %4 = arith.cmpi slt, %2, %3 : vector<2x256xi32>
    %5 = arith.subf %0, %1 : vector<2x256xf32>
    %6 = arith.select %4, %5, %0 : vector<2x256xi1>, vector<2x256xf32>
    %c0_2 = arith.constant 0 : index
    %c0_3 = arith.constant 0 : index
    %7 = vector.load %arg2[%c0_2, %c0_3] : memref<2x256xf32, #tpu.memory_space<vmem>>, vector<2x256xf32>
    tpu.vector_store %arg2[%c0_2, %c0_3], %6 {strides = array<i32>} : memref<2x256xf32, #tpu.memory_space<vmem>>, vector<2x256xf32>,
    return
  }
  func.func @transform_0(%arg0: i32) -> (i32, i32) {
    %c0_i32 = arith.constant 0 : i32
    %c0_i32_0 = arith.constant 0 : i32
    return %arg0, %c0_i32 : i32, i32
  }
  func.func @transform_1(%arg0: i32) -> (i32, i32) {
    %c0_i32 = arith.constant 0 : i32
    %c0_i32_0 = arith.constant 0 : i32
    return %arg0, %c0_i32 : i32, i32
  }
}

</mosaic_0001>

<llo_original>
// kernel: tpu_custom_call.1
$region0: #{tpu_custom_call.1}
  #allocation0 [shape = 'u32[]', space=smem, size = 0x4, offset = 0x4, fixed_abs, tag = 'smem constant byte address 0x4 - core index']
  #allocation1 [shape = 'u32[72,128]{1,0:T(1,128)}', space=vmem, size = 0x9000, scoped, tag = 'internal scratch']
  %s0 = inlined_call_operand.hbm [shape: f32[2,256], index: 0, kind: input, shape index: {}]
  %s1 = inlined_call_operand.hbm [shape: f32[2,256], index: 1, kind: output, shape index: {}]
  %s2 = sld [smem:[#allocation0]]
  $region18: #{tpu_custom_call.1} parent=0
    _
  %s4 = ssub.s32 1, %s2
  %s5 = scalar_select 0, %s4, %s2
  $region1: #{tpu_custom_call.1} parent=0
    #allocation2 [shape = 'u8[2048]{0}', space=vmem, size = 0x800, scoped, tag = 'input window, operand 0, single buffered']
    #allocation3 [shape = 's32[1]{0}', space=sflag, size = 0x4, scoped, tag = 'scoped memory for tpu_custom_call.1']
    #allocation4 [shape = 's32[1]{0}', space=sflag, size = 0x4, scoped, tag = 'scoped memory for tpu_custom_call.1']
    #allocation5 [shape = 'u8[2048]{0}', space=vmem, size = 0x800, scoped, tag = 'output window, operand 0, single buffered']
    %6 = vsyncpa [#allocation3], 0
    %7 = vsyncpa [#allocation4], 0
    // Predicated region
    $region2: #{tpu_custom_call.1} parent=1 // pred_check
      _
    $region3: #{tpu_custom_call.1} parent=1 // pred_check_branch
      %9 = sbr.rel (0) target = $region5
    $region4: #{tpu_custom_call.1} parent=1 // pred_region
      %11 = vsyncadd [#allocation3], 0
      %s13 = sshll.u32 %s0, 4
      %s14 = int_to_ptr.hbm [resolvable:$true] %s13
      %s15 = sshll.u32 [#allocation2], 4
      %s16 = int_to_ptr.vmem [resolvable:$true] %s15
      %18 = dma.hbm_to_vmem [thread:$0]  %s14, 64, %s16, [#allocation3]
    $region5: #{tpu_custom_call.1} parent=1 // pred_fallthru
      _
    // Predicated region
    $region6: #{tpu_custom_call.1} parent=1 // pred_check
      _
    $region7: #{tpu_custom_call.1} parent=1 // pred_check_branch
      %20 = sbr.rel (0) target = $region9
    $region8: #{tpu_custom_call.1} parent=1 // pred_region
      %22 = dma.done [#allocation3], 64
    $region9: #{tpu_custom_call.1} parent=1 // pred_fallthru
      _
    %v23 = vld [vmem:[#allocation2] sm:$0xf]
    %25 = vst [vmem:[#allocation1] ss:$4 sm:$0xff] %v23
    %v26 = vld.sshfl [vmem:[#allocation1] sm:$0xff pattern:$0x73625140]
    %v27 = vld.sshfl [vmem:[#allocation1 + $0x8] sm:$0xff pattern:$0x73625140]
    %30 = vrot.lane.b32.xlu0 %v26, 96
    %v31 = vpop.permute.xlu0 %30
    %32 = vrot.lane.b32.xlu0 %v27, 96
    %v33 = vpop.permute.xlu0 %32
    %v34 = vlaneseq
    %v35 = vand.u32 %v34, 127
    %vm36 = vcmp.lt.s32.totalorder %v35, 96
    %v37 = vsel %vm36, %v31, %v33
    %v38 = vsel %vm36, %v33, %v31
    %v39 = vadd.s32 %v35, 128
    %vm40 = vcmp.lt.s32.totalorder %v35, 224
    %vm41 = vcmp.lt.s32.totalorder %v39, 224
    %v44 = vrot.slane %v38, 6
    %vm45 = vcmask 1041408
    %v46 = vsel %vm45, %v37, %v44
    %v48 = vsub.f32 %v23, %v46
    %50 = vst [vmem:[#allocation1] ss:$4 sm:$0xff] %v48
    %v51 = vld.sshfl [vmem:[#allocation1] sm:$0xff pattern:$0x73625140]
    %v52 = vld.sshfl [vmem:[#allocation1 + $0x8] sm:$0xff pattern:$0x73625140]
    %55 = vst [vmem:[#allocation1] ss:$4 sm:$0xff] %v23
    %v56 = vld.sshfl [vmem:[#allocation1] sm:$0xff pattern:$0x73625140]
    %v57 = vld.sshfl [vmem:[#allocation1 + $0x8] sm:$0xff pattern:$0x73625140]
    %v60 = vsel %vm40, %v51, %v56
    %v61 = vsel %vm41, %v52, %v57
    %v64 = vrot.slane %v61, 6
    %v65 = vsel %vm45, %v60, %v64
    %67 = vst [vmem:[#allocation5] sm:$0xf] %v65
    // Predicated region
    $region10: #{tpu_custom_call.1} parent=1 // pred_check
      _
    $region11: #{tpu_custom_call.1} parent=1 // pred_check_branch
      %69 = sbr.rel (0) target = $region13
    $region12: #{tpu_custom_call.1} parent=1 // pred_region
      %71 = vsyncadd [#allocation4], 0
      %s73 = sshll.u32 [#allocation5], 4
      %s74 = int_to_ptr.vmem [resolvable:$true] %s73
      %s75 = sshll.u32 %s1, 4
      %s76 = int_to_ptr.hbm [resolvable:$true] %s75
      %78 = dma.vmem_to_hbm [thread:$0]  %s74, 64, %s76, [#allocation4]
    $region13: #{tpu_custom_call.1} parent=1 // pred_fallthru
      _
    // Predicated region
    $region14: #{tpu_custom_call.1} parent=1 // pred_check
      _
    $region15: #{tpu_custom_call.1} parent=1 // pred_check_branch
      %80 = sbr.rel (0) target = $region17
    $region16: #{tpu_custom_call.1} parent=1 // pred_region
      %82 = dma.done [#allocation4], 64
    $region17: #{tpu_custom_call.1} parent=1 // pred_fallthru
      _
    %83 = vsyncpa [#allocation3], 1
    %84 = vsyncpa [#allocation4], 1

</llo_original>
